<compile_context>
chip_gen: v7x
topology: tpu7x:2x2x1
jax: 0.10.0
libtpu: 0.0.40
codegen_flags: <defaults>
</compile_context>

<pallas_src>
import functools

import jax
import jax.numpy as jnp
from jax.experimental import pallas as pl
from jax.experimental.pallas import tpu as pltpu


def _round_up(x, m):
    return ((x + m - 1) // m) * m


def _vmem_capacity_bytes():
    """Physical VMEM per core; conservative 64 MiB (v7x) fallback."""
    try:
        info = pltpu.get_tpu_info()
        cap = getattr(info, "vmem_capacity_bytes", None)
        if cap:
            return int(cap)
    except Exception:
        pass
    return 64 * 1024 * 1024


def _pad_gates(w, H, Hp):
    """Pad each of the 4 gate chunks along the last axis from H to Hp lanes."""
    if H == Hp:
        return w
    parts = []
    for g in range(4):
        chunk = w[..., g * H:(g + 1) * H]
        pad = [(0, 0)] * (w.ndim - 1) + [(0, Hp - H)]
        parts.append(jnp.pad(chunk, pad))
    return jnp.concatenate(parts, axis=-1)


# ---------------------------------------------------------------------------
# Tile selection driven by an explicit VMEM budget
# ---------------------------------------------------------------------------
def _recurrence_tiles(B, T, Hp, wx_bytes, h_bytes, r_bytes, budget,
                      max_time_chunk):
    # Batch tile: >= 2 tiles when B >= 16 so both v7x TensorCores get work;
    # capped at 128 rows (matches v5e's 128-wide MXU, keeps vreg/vst pressure
    # down on the serial critical path).
    if B >= 16:
        tb = min(_round_up(pl.cdiv(B, 2), 8), 128)
    else:
        tb = _round_up(B, 8)
    fourHp = 4 * Hp
    fixed = (Hp * fourHp * r_bytes          # resident R (single-buffered)
             + 2 * tb * Hp * 4              # h0 + c0 (f32)
             + 2 * tb * Hp * 4              # f32 h/c scratch
             + 2 * tb * Hp * h_bytes)       # final-c output buffers
    per_step = (2 * tb * fourHp * wx_bytes  # Wx chunk double buffer
                + 2 * tb * Hp * h_bytes)    # h_seq chunk double buffer
    tc = (budget - fixed) // per_step if budget > fixed else 1
    tc = int(max(1, min(tc, max_time_chunk, T)))
    return tb, tc


def _projection_tiles(M, D, fourHp, xw_bytes, out_bytes, budget):
    # TODO(synk): add K-tiling (f32 accumulator) for very large D where the
    # full-D operand blocks alone approach the VMEM budget.
    def fits(tm, tn):
        need = (2 * tm * D * xw_bytes        # x tiles (double buffered)
                + 2 * D * tn * xw_bytes      # W tiles
                + 2 * tn * 4                 # bias tiles (f32)
                + 2 * tm * tn * out_bytes)   # output tiles
        return need <= budget

    tn_pref = 1024 if fourHp % 1024 == 0 else 512
    for tn in (tn_pref, 512, 128):
        if fourHp % tn:
            continue
        for tm in (256, 128, 64, 32, 16, 8):
            if M % tm == 0 and fits(tm, tn):
                return tm, tn
    return 8, 128   # last resort; relies on the raised vmem limit


# ---------------------------------------------------------------------------
# Kernel 1: hoisted input projection  Wx = x @ W + bias
# ---------------------------------------------------------------------------
def _wx_kernel(x_ref, w_ref, b_ref, out_ref):
    out_ref[...] = (
        jnp.dot(x_ref[...], w_ref[...], preferred_element_type=jnp.float32)
        + b_ref[...]
    ).astype(out_ref.dtype)


def _input_projection(x2d, w_pad, b_pad, *, tm, tn, out_dtype, vmem_limit):
    M, D = x2d.shape
    N = w_pad.shape[1]
    return pl.pallas_call(
        _wx_kernel,
        out_shape=jax.ShapeDtypeStruct((M, N), out_dtype),
        grid_spec=pltpu.PrefetchScalarGridSpec(
            num_scalar_prefetch=0,
            grid=(M // tm, N // tn),
            in_specs=[
                pl.BlockSpec((tm, D), lambda i, j: (i, 0)),   # x rows
                pl.BlockSpec((D, tn), lambda i, j: (0, j)),   # W columns
                pl.BlockSpec((1, tn), lambda i, j: (0, j)),   # bias (folded)
            ],
            out_specs=pl.BlockSpec((tm, tn), lambda i, j: (i, j)),
        ),
        compiler_params=pltpu.CompilerParams(
            dimension_semantics=("parallel", "parallel"),
            vmem_limit_bytes=vmem_limit,
        ),
    )(x2d, w_pad, b_pad)


# ---------------------------------------------------------------------------
# Kernel 2: sequential recurrence.  Grid = (batch_tiles, time_chunks).
# ---------------------------------------------------------------------------
def _lstm_recurrent_kernel(wx_ref, r_ref, h0_ref, c0_ref,
                           h_out_ref, c_fin_ref,
                           h_scr, c_scr, *,
                           hidden_p, time_chunk, seq_len, ragged, unroll):
    Hp = hidden_p
    tc = time_chunk

    @pl.when(pl.program_id(1) == 0)
    def _():
        h_scr[...] = h0_ref[...].astype(jnp.float32)
        c_scr[...] = c0_ref[...].astype(jnp.float32)

    t_base = pl.program_id(1) * tc

    def step(s, carry):
        h_prev = h_scr[...]
        c_prev = c_scr[...]
        # v = h_{t-1} @ R + (x_t @ W + bias); f32 accumulation on the MXU,
        # bf16 Wx / R upcast for free on the VPU.
        v = (jnp.dot(h_prev.astype(r_ref.dtype), r_ref[...],
                     preferred_element_type=jnp.float32)
             + wx_ref[s].astype(jnp.float32))
        # Lane-aligned gate slices (Hp is a multiple of 128).
        i = jax.nn.sigmoid(v[:, 0 * Hp:1 * Hp])
        g = jnp.tanh(v[:, 1 * Hp:2 * Hp])
        f = jax.nn.sigmoid(v[:, 2 * Hp:3 * Hp])
        o = jax.nn.sigmoid(v[:, 3 * Hp:4 * Hp])
        c_new = f * c_prev + i * g
        h_new = o * jnp.tanh(c_new)
        if ragged:
            # Padded tail time steps must not advance the carry.
            @pl.when(t_base + s < seq_len)
            def _():
                h_scr[...] = h_new
                c_scr[...] = c_new
        else:
            h_scr[...] = h_new
            c_scr[...] = c_new
        h_out_ref[s] = h_new.astype(h_out_ref.dtype)   # padded rows sliced off
        return carry

    jax.lax.fori_loop(0, tc, step, 0, unroll=unroll)

    # Final cell state only, written once on the last time chunk.
    @pl.when(pl.program_id(1) == pl.num_programs(1) - 1)
    def _():
        c_fin_ref[...] = c_scr[...].astype(c_fin_ref.dtype)


def _lstm_recurrence(wx, r_pad, h0p, c0p, *, tb, tc, seq_len, out_dtype,
                     vmem_limit, unroll, single_buffer_invariants):
    Tp, Bp, fourHp = wx.shape
    Hp = fourHp // 4
    ragged = (Tp != seq_len)

    def invariant_spec(shape, index_map):
        # R / h0 / c0 never change within a batch tile -> one buffer is enough.
        if single_buffer_invariants:
            return pl.BlockSpec(shape, index_map, pipeline_mode=pl.Buffered(1))
        return pl.BlockSpec(shape, index_map)

    kfn = functools.partial(_lstm_recurrent_kernel, hidden_p=Hp,
                            time_chunk=tc, seq_len=seq_len,
                            ragged=ragged, unroll=unroll)
    return pl.pallas_call(
        kfn,
        out_shape=(
            jax.ShapeDtypeStruct((Tp, Bp, Hp), out_dtype),   # h_1 .. h_Tp
            jax.ShapeDtypeStruct((Bp, Hp), out_dtype),       # c_T only
        ),
        grid_spec=pltpu.PrefetchScalarGridSpec(
            num_scalar_prefetch=0,
            grid=(Bp // tb, Tp // tc),
            in_specs=[
                pl.BlockSpec((tc, tb, fourHp), lambda b, t: (t, b, 0)),  # Wx
                invariant_spec((Hp, fourHp), lambda b, t: (0, 0)),       # R
                invariant_spec((tb, Hp), lambda b, t: (b, 0)),           # h0
                invariant_spec((tb, Hp), lambda b, t: (b, 0)),           # c0
            ],
            out_specs=[
                pl.BlockSpec((tc, tb, Hp), lambda b, t: (t, b, 0)),      # h seq
                pl.BlockSpec((tb, Hp), lambda b, t: (b, 0)),             # final c
            ],
            scratch_shapes=[
                pltpu.VMEM((tb, Hp), jnp.float32),   # h carry
                pltpu.VMEM((tb, Hp), jnp.float32),   # c carry
            ],
        ),
        compiler_params=pltpu.CompilerParams(
            # batch tiles -> both TensorCores on v7x; time stays sequential
            dimension_semantics=("parallel", "arbitrary"),
            vmem_limit_bytes=vmem_limit,
        ),
    )(wx, r_pad, h0p, c0p)


# ---------------------------------------------------------------------------
# Public forward pass: LSTM.forward(input) with batch_first=False,
# zoneout=0, dropout=0 (eval mode).
# ---------------------------------------------------------------------------
def lstm_forward(x, kernel, recurrent_kernel, bias, state=None,
                 matmul_dtype=jnp.bfloat16, max_time_chunk=16):
    """Returns (output, (h_n, c_n)).

    output: (T, B, H);  h_n, c_n: (1, B, H).
    matmul_dtype controls the MXU operand / streamed-Wx precision
    (default bf16; accumulation and the h/c carry stay f32).
    """
    T, B, D = x.shape
    H = recurrent_kernel.shape[0]
    assert kernel.shape == (D, 4 * H)
    assert bias.shape == (4 * H,)

    mm_dtype = jnp.dtype(x.dtype if matmul_dtype is None else matmul_dtype)
    wx_dtype = jnp.bfloat16 if mm_dtype == jnp.bfloat16 else jnp.float32

    cap = _vmem_capacity_bytes()
    budget = int(cap * 0.70)           # tile-planning budget
    vmem_limit = int(cap * 0.90)       # raised scoped-VMEM limit

    Hp = _round_up(H, 128)             # lane-aligned gate width
    fourHp = 4 * Hp
    wx_bytes = jnp.dtype(wx_dtype).itemsize
    h_bytes = jnp.dtype(x.dtype).itemsize
    xw_bytes = jnp.dtype(mm_dtype).itemsize

    tb, tc = _recurrence_tiles(B, T, Hp, wx_bytes, h_bytes, xw_bytes,
                               budget, max_time_chunk)
    Bp = _round_up(B, tb)
    Tp = _round_up(T, tc)

    # Zero-pad weights so every gate occupies a full Hp-lane slab; padded
    # lanes/rows are exact zeros -> identical math, lane-dense layout.
    w_pad = _pad_gates(kernel, H, Hp).astype(mm_dtype)                   # (D, 4Hp)
    r_pad = _pad_gates(jnp.pad(recurrent_kernel, ((0, Hp - H), (0, 0))),
                       H, Hp).astype(mm_dtype)                           # (Hp, 4Hp)
    b_pad = _pad_gates(bias[None, :].astype(jnp.float32), H, Hp)         # (1, 4Hp)

    # ----- hoisted input projection: one big (Tp*Bp, D) x (D, 4Hp) GEMM -----
    x_pad = jnp.pad(x, ((0, Tp - T), (0, Bp - B), (0, 0))).astype(mm_dtype)
    M = Tp * Bp                                   # multiple of 8
    x2d = x_pad.reshape(M, D)
    tm, tn = _projection_tiles(M, D, fourHp, xw_bytes, wx_bytes, budget)
    wx2d = _input_projection(x2d, w_pad, b_pad, tm=tm, tn=tn,
                             out_dtype=wx_dtype, vmem_limit=vmem_limit)
    wx = wx2d.reshape(Tp, Bp, fourHp)             # metadata-only (tm | M)

    # ----- initial state (f32 carry precision) -----
    if state is None:
        h0p = jnp.zeros((Bp, Hp), jnp.float32)
        c0p = jnp.zeros((Bp, Hp), jnp.float32)
    else:
        h0, c0 = state
        h0p = jnp.pad(h0.astype(jnp.float32), ((0, Bp - B), (0, Hp - H)))
        c0p = jnp.pad(c0.astype(jnp.float32), ((0, Bp - B), (0, Hp - H)))

    # ----- sequential recurrence (chunked, in-kernel time loop) -----
    unroll = max(1, min(tc, 4))        # partial unroll: LLO visibility w/o spills
    rec_kwargs = dict(tb=tb, tc=tc, seq_len=T, out_dtype=x.dtype,
                      vmem_limit=vmem_limit, unroll=unroll)
    try:
        h_seq_p, c_fin_p = _lstm_recurrence(wx, r_pad, h0p, c0p,
                                            single_buffer_invariants=True,
                                            **rec_kwargs)
    except Exception:
        # Graceful fallback if this jax build rejects pipeline_mode/Buffered(1).
        h_seq_p, c_fin_p = _lstm_recurrence(wx, r_pad, h0p, c0p,
                                            single_buffer_invariants=False,
                                            **rec_kwargs)

    output = h_seq_p[:T, :B, :H]                  # h_1 .. h_T
    h_n = output[T - 1][None]
    c_n = c_fin_p[:B, :H][None]
    return output, (h_n, c_n)


# ---------------- parameter initialization (deterministic) ----------------
def init_lstm_params(key, input_size, hidden_size, forget_bias=1.0,
                     dtype=jnp.float32):
    H = hidden_size
    keys = jax.random.split(key, 8)
    a = (6.0 / (input_size + H)) ** 0.5
    kernel_chunks = [
        jax.random.uniform(keys[i], (input_size, H), dtype, minval=-a, maxval=a)
        for i in range(4)
    ]
    kernel = jnp.concatenate(kernel_chunks, axis=-1)
    rec_chunks = []
    for i in range(4):
        m = jax.random.normal(keys[4 + i], (H, H), dtype)
        q, r = jnp.linalg.qr(m)
        q = q * jnp.sign(jnp.diag(r))[None, :]
        rec_chunks.append(q)
    recurrent_kernel = jnp.concatenate(rec_chunks, axis=-1)
    bias = jnp.zeros((4 * H,), dtype)
    bias = bias.at[2 * H:3 * H].set(forget_bias)
    return kernel, recurrent_kernel, bias


# ---------------- pure-JAX reference for verification ----------------
def lstm_reference(x, kernel, recurrent_kernel, bias, state=None):
    T, B, D = x.shape
    H = recurrent_kernel.shape[0]
    if state is None:
        h = jnp.zeros((B, H), x.dtype)
        c = jnp.zeros((B, H), x.dtype)
    else:
        h, c = state
    wx = jnp.einsum("tbd,dk->tbk", x, kernel)

    def step(carry, wx_t):
        h, c = carry
        v = h @ recurrent_kernel + wx_t + bias
        i, g, f, o = jnp.split(v, 4, axis=-1)
        i = jax.nn.sigmoid(i)
        g = jnp.tanh(g)
        f = jax.nn.sigmoid(f)
        o = jax.nn.sigmoid(o)
        c_new = f * c + i * g
        h_new = o * jnp.tanh(c_new)
        return (h_new, c_new), h_new

    (h_n, c_n), h_seq = jax.lax.scan(step, (h, c), wx)
    return h_seq, (h_n[None], c_n[None])


if __name__ == "__main__":
    # TODO(synk): zoneout/dropout (training-time regularization) and the
    # backward pass are not implemented; this is the eval-mode forward.
    T, B, D, H = 8, 4, 16, 32
    key = jax.random.PRNGKey(0)
    k_param, k_x, k_h, k_c = jax.random.split(key, 4)

    kernel, recurrent_kernel, bias = init_lstm_params(k_param, D, H,
                                                      forget_bias=1.0)
    x = jax.random.normal(k_x, (T, B, D), jnp.float32)

    ref_out, (ref_h, ref_c) = lstm_reference(x, kernel, recurrent_kernel, bias)

    # 1) full-precision path (tight numerical check)
    out_f32, (h_f32, c_f32) = lstm_forward(x, kernel, recurrent_kernel, bias,
                                           matmul_dtype=jnp.float32)
    out_f32 = jax.block_until_ready(out_f32)
    assert out_f32.shape == (T, B, H)
    assert h_f32.shape == (1, B, H) and c_f32.shape == (1, B, H)
    assert jnp.allclose(out_f32, ref_out, atol=1e-4, rtol=1e-4)
    assert jnp.allclose(h_f32, ref_h, atol=1e-4, rtol=1e-4)
    assert jnp.allclose(c_f32, ref_c, atol=1e-4, rtol=1e-4)

    # 2) default fast path: bf16 MXU operands / bf16 streamed Wx & R,
    #    f32 accumulation + f32 h/c carry (loose tolerance, expected precision)
    out_bf, (h_bf, c_bf) = lstm_forward(x, kernel, recurrent_kernel, bias)
    out_bf = jax.block_until_ready(out_bf)
    assert jnp.allclose(out_bf, ref_out, atol=1e-1, rtol=1e-1)
    assert jnp.allclose(h_bf, ref_h, atol=1e-1, rtol=1e-1)
    assert jnp.allclose(c_bf, ref_c, atol=1e-1, rtol=1e-1)

    # 3) ragged-T path (T % tc != 0 -> padded + predicated tail) with a
    #    nonzero initial state, f32
    h0 = jax.random.normal(k_h, (B, H), jnp.float32) * 0.1
    c0 = jax.random.normal(k_c, (B, H), jnp.float32) * 0.1
    out_r, (h_r, c_r) = lstm_forward(x, kernel, recurrent_kernel, bias,
                                     state=(h0, c0),
                                     matmul_dtype=jnp.float32,
                                     max_time_chunk=3)
    out_r = jax.block_until_ready(out_r)
    ref_out2, (ref_h2, ref_c2) = lstm_reference(x, kernel, recurrent_kernel,
                                                bias, state=(h0, c0))
    assert jnp.allclose(out_r, ref_out2, atol=1e-4, rtol=1e-4)
    assert jnp.allclose(h_r, ref_h2, atol=1e-4, rtol=1e-4)
    assert jnp.allclose(c_r, ref_c2, atol=1e-4, rtol=1e-4)

    print("KERNEL_OK")
</pallas_src>

<mosaic_0001>
module attributes {stable_mosaic.version = 11 : i64} {
  func.func @_wx_kernel(%arg0: i32, %arg1: i32, %arg2: memref<64x16xf32, #tpu.memory_space<vmem>>, %arg3: memref<16x512xf32, #tpu.memory_space<vmem>>, %arg4: memref<1x512xf32, #tpu.memory_space<vmem>>, %arg5: memref<64x512xf32, #tpu.memory_space<vmem>>) attributes {dimension_semantics = [#tpu.dimension_semantics<parallel>, #tpu.dimension_semantics<parallel>], iteration_bounds = array<i64: 1, 1>, scalar_prefetch = 0 : i64, scratch_operands = 0 : i64, tpu.core_type = #tpu.core_type<tc>, window_params = [{transform_indices = @transform_0, window_bounds = array<i64: 64, 16>}, {transform_indices = @transform_1, window_bounds = array<i64: 16, 512>}, {transform_indices = @transform_2, window_bounds = array<i64: 1, 512>}, {transform_indices = @transform_3, window_bounds = array<i64: 64, 512>}]} {
    %c0 = arith.constant 0 : index
    %c0_0 = arith.constant 0 : index
    %0 = vector.load %arg2[%c0, %c0_0] : memref<64x16xf32, #tpu.memory_space<vmem>>, vector<64x16xf32>
    %c0_1 = arith.constant 0 : index
    %c0_2 = arith.constant 0 : index
    %1 = vector.load %arg3[%c0_1, %c0_2] : memref<16x512xf32, #tpu.memory_space<vmem>>, vector<16x512xf32>
    %cst = arith.constant dense<0.000000e+00> : vector<64x512xf32>
    %2 = tpu.matmul %0, %1, %cst {dimension_numbers = #tpu.dot_dimension_numbers<[1], [0], [0], [1], [0, 0, 1, 1], [], []>} : vector<64x16xf32>, vector<16x512xf32>, vector<64x512xf32> -> vector<64x512xf32>
    %c0_3 = arith.constant 0 : index
    %c0_4 = arith.constant 0 : index
    %3 = vector.load %arg4[%c0_3, %c0_4] : memref<1x512xf32, #tpu.memory_space<vmem>>, vector<1x512xf32>
    %4 = vector.broadcast %3 : vector<1x512xf32> to vector<64x512xf32>
    %5 = arith.addf %2, %4 : vector<64x512xf32>
    %c0_5 = arith.constant 0 : index
    %c0_6 = arith.constant 0 : index
    %6 = vector.load %arg5[%c0_5, %c0_6] : memref<64x512xf32, #tpu.memory_space<vmem>>, vector<64x512xf32>
    tpu.vector_store %arg5[%c0_5, %c0_6], %5 {strides = array<i32>} : memref<64x512xf32, #tpu.memory_space<vmem>>, vector<64x512xf32>,
    return
  }
  func.func @transform_0(%arg0: i32, %arg1: i32) -> (i32, i32) {
    %c0_i32 = arith.constant 0 : i32
    %c0_i32_0 = arith.constant 0 : i32
    return %arg0, %c0_i32 : i32, i32
  }
  func.func @transform_1(%arg0: i32, %arg1: i32) -> (i32, i32) {
    %c0_i32 = arith.constant 0 : i32
    %c0_i32_0 = arith.constant 0 : i32
    return %c0_i32, %arg1 : i32, i32
  }
  func.func @transform_2(%arg0: i32, %arg1: i32) -> (i32, i32) {
    %c0_i32 = arith.constant 0 : i32
    %c0_i32_0 = arith.constant 0 : i32
    return %c0_i32, %arg1 : i32, i32
  }
  func.func @transform_3(%arg0: i32, %arg1: i32) -> (i32, i32) {
    %c0_i32 = arith.constant 0 : i32
    return %arg0, %arg1 : i32, i32
  }
}

</mosaic_0001>

<llo_original>
// kernel: tpu_custom_call.1
$region0: #{tpu_custom_call.1}
  #allocation0 [shape = 'u32[]', space=smem, size = 0x4, offset = 0x4, fixed_abs, tag = 'smem constant byte address 0x4 - core index']
  #allocation1 [shape = 'u32[144,128]{1,0:T(1,128)}', space=vmem, size = 0x12000, scoped, tag = 'internal scratch']
  %s0 = inlined_call_operand.vmem [shape: f32[64,16], index: 0, kind: input, shape index: {}]
  %s1 = inlined_call_operand.vmem [shape: f32[16,512], index: 1, kind: input, shape index: {}]
  %s2 = inlined_call_operand.vmem [shape: f32[1,512], index: 2, kind: input, shape index: {}]
  %s3 = inlined_call_operand.hbm [shape: f32[64,512], index: 3, kind: output, shape index: {}]
  %s4 = sld [smem:[#allocation0]]
  $region22: #{tpu_custom_call.1} parent=0
    _
  %s6 = ssub.s32 1, %s4
  %s7 = scalar_select 0, %s6, %s4
  $region1: #{tpu_custom_call.1} parent=0
    #allocation2 [shape = 'u8[131072]{0}', space=vmem, size = 0x20000, scoped, tag = 'output window, operand 0, single buffered']
    #allocation3 [shape = 's32[1]{0}', space=sflag, size = 0x4, scoped, tag = 'scoped memory for tpu_custom_call.1']
    %8 = vsyncpa [#allocation3], 0
    // Predicated region
    $region2: #{tpu_custom_call.1} parent=1 // pred_check
      _
    $region3: #{tpu_custom_call.1} parent=1 // pred_check_branch
      %10 = sbr.rel (0) target = $region5
    $region4: #{tpu_custom_call.1} parent=1 // pred_region
      _
    $region5: #{tpu_custom_call.1} parent=1 // pred_fallthru
      _
    // Predicated region
    $region6: #{tpu_custom_call.1} parent=1 // pred_check
      _
    $region7: #{tpu_custom_call.1} parent=1 // pred_check_branch
      %12 = sbr.rel (0) target = $region9
    $region8: #{tpu_custom_call.1} parent=1 // pred_region
      _
    $region9: #{tpu_custom_call.1} parent=1 // pred_fallthru
      _
    // Predicated region
    $region10: #{tpu_custom_call.1} parent=1 // pred_check
      _
    $region11: #{tpu_custom_call.1} parent=1 // pred_check_branch
      %14 = sbr.rel (0) target = $region13
    $region12: #{tpu_custom_call.1} parent=1 // pred_region
      _
    $region13: #{tpu_custom_call.1} parent=1 // pred_fallthru
      _
    %v15 = vld [vmem:[%s0] sm:$0xff]
    %v16 = vld [vmem:[%s0 + $0x8] sm:$0xff]
    %v17 = vld [vmem:[%s0 + $0x10] sm:$0xff]
    %v18 = vld [vmem:[%s0 + $0x18] sm:$0xff]
    %v19 = vld [vmem:[%s0 + $0x20] sm:$0xff]
    %v20 = vld [vmem:[%s0 + $0x28] sm:$0xff]
    %v21 = vld [vmem:[%s0 + $0x30] sm:$0xff]
    %v22 = vld [vmem:[%s0 + $0x38] sm:$0xff]
    %v23 = vld [vmem:[%s1] sm:$0xff]
    %v24 = vld [vmem:[%s1 + $0x8] sm:$0xff]
    %v25 = vld [vmem:[%s1 + $0x10] sm:$0xff]
    %v26 = vld [vmem:[%s1 + $0x18] sm:$0xff]
    %v27 = vld [vmem:[%s1 + $0x20] sm:$0xff]
    %v28 = vld [vmem:[%s1 + $0x28] sm:$0xff]
    %v29 = vld [vmem:[%s1 + $0x30] sm:$0xff]
    %v30 = vld [vmem:[%s1 + $0x38] sm:$0xff]
    %v31 = vld [vmem:[%s2] sm:$0xf]
    %v33 = vlaneseq
    %v34 = vshrl.u32 %v33, 7
    %v35 = vsub.s32 0, %v34
    %v36 = vrot.slane %v31, %v35
    %v37 = vlaneseq
    %v38 = vshrl.u32 %v37, 7
    %v39 = vsub.s32 1, %v38
    %v40 = vrot.slane %v31, %v39
    %v41 = vlaneseq
    %v42 = vshrl.u32 %v41, 7
    %v43 = vsub.s32 2, %v42
    %v44 = vrot.slane %v31, %v43
    %v45 = vlaneseq
    %v46 = vshrl.u32 %v45, 7
    %v47 = vsub.s32 3, %v46
    %v48 = vrot.slane %v31, %v47
    %vm53 = vcmask 130048
    %v55 = vsel %vm53, %v15, 0
    %v58 = vsel %vm53, %v16, 0
    %v61 = vsel %vm53, %v17, 0
    %v64 = vsel %vm53, %v18, 0
    %v67 = vsel %vm53, %v19, 0
    %v70 = vsel %vm53, %v20, 0
    %v73 = vsel %vm53, %v21, 0
    %v76 = vsel %vm53, %v22, 0
    %78 = vmatprep.subr.mxu0 %v24
    %79 = vmatpush1.msra.mxu0 %v23
    %80 = vmatprep.subr.mxu0 %v28
    %81 = vmatpush1.msra.mxu0 %v27
    %82 = vmatprep.subr.mxu0 0.0
    %83 = vmatpush1.msra.mxu0 0.0
    %84 = vmatprep.subr.mxu0 0.0
    %85 = vmatpush1.msra.mxu0 0.0
    %86 = vmatprep.subr.mxu0 0.0
    %87 = vmatpush1.msra.mxu0 0.0
    %88 = vmatprep.subr.mxu0 0.0
    %89 = vmatpush1.msra.mxu0 0.0
    %90 = vmatprep.subr.mxu0 0.0
    %91 = vmatpush1.msra.mxu0 0.0
    %92 = vmatprep.subr.mxu0 0.0
    %93 = vmatpush1.msra.mxu0 0.0
    %94 = vmatprep.subr.mxu0 0.0
    %95 = vmatpush1.msra.mxu0 0.0
    %96 = vmatprep.subr.mxu0 0.0
    %97 = vmatpush1.msra.mxu0 0.0
    %98 = vmatprep.subr.mxu0 0.0
    %99 = vmatpush1.msra.mxu0 0.0
    %100 = vmatprep.subr.mxu0 0.0
    %101 = vmatpush1.msra.mxu0 0.0
    %102 = vmatprep.subr.mxu0 0.0
    %103 = vmatpush1.msra.mxu0 0.0
    %104 = vmatprep.subr.mxu0 0.0
    %105 = vmatpush1.msra.mxu0 0.0
    %106 = vmatprep.subr.mxu0 0.0
    %107 = vmatpush1.msra.mxu0 0.0
    %108 = vmatprep.subr.mxu0 0.0
    %109 = vmatpush1.msra.mxu0 0.0
    %110 = vmatprep.subr.mxu0 0.0
    %111 = vmatpush1.msra.mxu0 0.0
    %112 = vmatprep.subr.mxu0 0.0
    %113 = vmatpush1.msra.mxu0 0.0
    %114 = vmatprep.subr.mxu0 0.0
    %115 = vmatpush1.msra.mxu0 0.0
    %116 = vmatprep.subr.mxu0 0.0
    %117 = vmatpush1.msra.mxu0 0.0
    %118 = vmatprep.subr.mxu0 0.0
    %119 = vmatpush1.msra.mxu0 0.0
    %120 = vmatprep.subr.mxu0 0.0
    %121 = vmatpush1.msra.mxu0 0.0
    %122 = vmatprep.subr.mxu0 0.0
    %123 = vmatpush1.msra.mxu0 0.0
    %124 = vmatprep.subr.mxu0 0.0
    %125 = vmatpush1.msra.mxu0 0.0
    %126 = vmatprep.subr.mxu0 0.0
    %127 = vmatpush1.msra.mxu0 0.0
    %128 = vmatprep.subr.mxu0 0.0
    %129 = vmatpush1.msra.mxu0 0.0
    %130 = vmatprep.subr.mxu0 0.0
    %131 = vmatpush1.msra.mxu0 0.0
    %132 = vmatprep.subr.mxu0 0.0
    %133 = vmatpush1.msra.mxu0 0.0
    %134 = vmatprep.subr.mxu0 0.0
    %135 = vmatpush1.msra.mxu0 0.0
    %136 = vmatprep.subr.mxu0 0.0
    %137 = vmatpush1.msra.mxu0 0.0
    %138 = vmatprep.subr.mxu0 0.0
    %139 = vmatpush1.msra.mxu0 0.0
    %140 = vmatprep.subr.mxu0 0.0
    %141 = vmatpush1.msra.mxu0 0.0
    %142 = vmatprep.mubr.f32.mxu0 0.0
    %143 = vmatmul.mubr.f32.gmra.mrb[0].mxu0 %v55
    %v144 = vpop.f32.mrb[0].mxu0
    %v145 = vadd.f32 %v36, %v144
    %v146 = vpop.f32.mrb[0].mxu0
    %v147 = vadd.f32 %v40, %v146
    %148 = vmatprep.mubr.f32.mxu0 0.0
    %149 = vmatmul.mubr.f32.gmra.mrb[0].mxu0 %v58
    %v150 = vpop.f32.mrb[0].mxu0
    %v151 = vadd.f32 %v36, %v150
    %v152 = vpop.f32.mrb[0].mxu0
    %v153 = vadd.f32 %v40, %v152
    %154 = vmatprep.mubr.f32.mxu0 0.0
    %155 = vmatmul.mubr.f32.gmra.mrb[0].mxu0 %v61
    %v156 = vpop.f32.mrb[0].mxu0
    %v157 = vadd.f32 %v36, %v156
    %v158 = vpop.f32.mrb[0].mxu0
    %v159 = vadd.f32 %v40, %v158
    %160 = vmatprep.mubr.f32.mxu0 0.0
    %161 = vmatmul.mubr.f32.gmra.mrb[0].mxu0 %v64
    %v162 = vpop.f32.mrb[0].mxu0
    %v163 = vadd.f32 %v36, %v162
    %v164 = vpop.f32.mrb[0].mxu0
    %v165 = vadd.f32 %v40, %v164
    %166 = vmatprep.mubr.f32.mxu0 0.0
    %167 = vmatmul.mubr.f32.gmra.mrb[0].mxu0 %v67
    %v168 = vpop.f32.mrb[0].mxu0
    %v169 = vadd.f32 %v36, %v168
    %v170 = vpop.f32.mrb[0].mxu0
    %v171 = vadd.f32 %v40, %v170
    %172 = vmatprep.mubr.f32.mxu0 0.0
    %173 = vmatmul.mubr.f32.gmra.mrb[0].mxu0 %v70
    %v174 = vpop.f32.mrb[0].mxu0
    %v175 = vadd.f32 %v36, %v174
    %v176 = vpop.f32.mrb[0].mxu0
    %v177 = vadd.f32 %v40, %v176
    %178 = vmatprep.mubr.f32.mxu0 0.0
    %179 = vmatmul.mubr.f32.gmra.mrb[0].mxu0 %v73
    %v180 = vpop.f32.mrb[0].mxu0
    %v181 = vadd.f32 %v36, %v180
    %v182 = vpop.f32.mrb[0].mxu0
    %v183 = vadd.f32 %v40, %v182
    %184 = vmatprep.mubr.f32.mxu0 0.0
    %185 = vmatmul.mubr.f32.gmra.mrb[0].mxu0 %v76
    %v186 = vpop.f32.mrb[0].mxu0
    %v187 = vadd.f32 %v36, %v186
    %v188 = vpop.f32.mrb[0].mxu0
    %v189 = vadd.f32 %v40, %v188
    %190 = vdwg.mxu0
    %191 = vmatprep.subr.mxu0 %v26
    %192 = vmatpush1.msra.mxu0 %v25
    %193 = vmatprep.subr.mxu0 %v30
    %194 = vmatpush1.msra.mxu0 %v29
    %195 = vmatprep.subr.mxu0 0.0
    %196 = vmatpush1.msra.mxu0 0.0
    %197 = vmatprep.subr.mxu0 0.0
    %198 = vmatpush1.msra.mxu0 0.0
    %199 = vmatprep.subr.mxu0 0.0
    %200 = vmatpush1.msra.mxu0 0.0
    %201 = vmatprep.subr.mxu0 0.0
    %202 = vmatpush1.msra.mxu0 0.0
    %203 = vmatprep.subr.mxu0 0.0
    %204 = vmatpush1.msra.mxu0 0.0
    %205 = vmatprep.subr.mxu0 0.0
    %206 = vmatpush1.msra.mxu0 0.0
    %207 = vmatprep.subr.mxu0 0.0
    %208 = vmatpush1.msra.mxu0 0.0
    %209 = vmatprep.subr.mxu0 0.0
    %210 = vmatpush1.msra.mxu0 0.0
    %211 = vmatprep.subr.mxu0 0.0
    %212 = vmatpush1.msra.mxu0 0.0
    %213 = vmatprep.subr.mxu0 0.0
    %214 = vmatpush1.msra.mxu0 0.0
    %215 = vmatprep.subr.mxu0 0.0
    %216 = vmatpush1.msra.mxu0 0.0
    %217 = vmatprep.subr.mxu0 0.0
    %218 = vmatpush1.msra.mxu0 0.0
    %219 = vmatprep.subr.mxu0 0.0
    %220 = vmatpush1.msra.mxu0 0.0
    %221 = vmatprep.subr.mxu0 0.0
    %222 = vmatpush1.msra.mxu0 0.0
    %223 = vmatprep.subr.mxu0 0.0
    %224 = vmatpush1.msra.mxu0 0.0
    %225 = vmatprep.subr.mxu0 0.0
    %226 = vmatpush1.msra.mxu0 0.0
    %227 = vmatprep.subr.mxu0 0.0
    %228 = vmatpush1.msra.mxu0 0.0
    %229 = vmatprep.subr.mxu0 0.0
    %230 = vmatpush1.msra.mxu0 0.0
    %231 = vmatprep.subr.mxu0 0.0
    %232 = vmatpush1.msra.mxu0 0.0
    %233 = vmatprep.subr.mxu0 0.0
    %234 = vmatpush1.msra.mxu0 0.0
    %235 = vmatprep.subr.mxu0 0.0
    %236 = vmatpush1.msra.mxu0 0.0
    %237 = vmatprep.subr.mxu0 0.0
    %238 = vmatpush1.msra.mxu0 0.0
    %239 = vmatprep.subr.mxu0 0.0
    %240 = vmatpush1.msra.mxu0 0.0
    %241 = vmatprep.subr.mxu0 0.0
    %242 = vmatpush1.msra.mxu0 0.0
    %243 = vmatprep.subr.mxu0 0.0
    %244 = vmatpush1.msra.mxu0 0.0
    %245 = vmatprep.subr.mxu0 0.0
    %246 = vmatpush1.msra.mxu0 0.0
    %247 = vmatprep.subr.mxu0 0.0
    %248 = vmatpush1.msra.mxu0 0.0
    %249 = vmatprep.subr.mxu0 0.0
    %250 = vmatpush1.msra.mxu0 0.0
    %251 = vmatprep.subr.mxu0 0.0
    %252 = vmatpush1.msra.mxu0 0.0
    %253 = vmatprep.subr.mxu0 0.0
    %254 = vmatpush1.msra.mxu0 0.0
    %255 = vmatprep.mubr.f32.mxu0 0.0
    %256 = vmatmul.mubr.f32.gmra.mrb[0].mxu0 %v55
    %v257 = vpop.f32.mrb[0].mxu0
    %v258 = vadd.f32 %v44, %v257
    %v259 = vpop.f32.mrb[0].mxu0
    %v260 = vadd.f32 %v48, %v259
    %261 = vmatprep.mubr.f32.mxu0 0.0
    %262 = vmatmul.mubr.f32.gmra.mrb[0].mxu0 %v58
    %v263 = vpop.f32.mrb[0].mxu0
    %v264 = vadd.f32 %v44, %v263
    %v265 = vpop.f32.mrb[0].mxu0
    %v266 = vadd.f32 %v48, %v265
    %267 = vmatprep.mubr.f32.mxu0 0.0
    %268 = vmatmul.mubr.f32.gmra.mrb[0].mxu0 %v61
    %v269 = vpop.f32.mrb[0].mxu0
    %v270 = vadd.f32 %v44, %v269
    %v271 = vpop.f32.mrb[0].mxu0
    %v272 = vadd.f32 %v48, %v271
    %273 = vmatprep.mubr.f32.mxu0 0.0
    %274 = vmatmul.mubr.f32.gmra.mrb[0].mxu0 %v64
    %v275 = vpop.f32.mrb[0].mxu0
    %v276 = vadd.f32 %v44, %v275
    %v277 = vpop.f32.mrb[0].mxu0
    %v278 = vadd.f32 %v48, %v277
    %279 = vmatprep.mubr.f32.mxu0 0.0
    %280 = vmatmul.mubr.f32.gmra.mrb[0].mxu0 %v67
    %v281 = vpop.f32.mrb[0].mxu0
    %v282 = vadd.f32 %v44, %v281
    %v283 = vpop.f32.mrb[0].mxu0
    %v284 = vadd.f32 %v48, %v283
    %285 = vmatprep.mubr.f32.mxu0 0.0
    %286 = vmatmul.mubr.f32.gmra.mrb[0].mxu0 %v70
    %v287 = vpop.f32.mrb[0].mxu0
    %v288 = vadd.f32 %v44, %v287
    %v289 = vpop.f32.mrb[0].mxu0
    %v290 = vadd.f32 %v48, %v289
    %291 = vmatprep.mubr.f32.mxu0 0.0
    %292 = vmatmul.mubr.f32.gmra.mrb[0].mxu0 %v73
    %v293 = vpop.f32.mrb[0].mxu0
    %v294 = vadd.f32 %v44, %v293
    %v295 = vpop.f32.mrb[0].mxu0
    %v296 = vadd.f32 %v48, %v295
    %297 = vmatprep.mubr.f32.mxu0 0.0
    %298 = vmatmul.mubr.f32.gmra.mrb[0].mxu0 %v76
    %v299 = vpop.f32.mrb[0].mxu0
    %v300 = vadd.f32 %v44, %v299
    %v301 = vpop.f32.mrb[0].mxu0
    %v302 = vadd.f32 %v48, %v301
    %303 = vdwg.mxu0
    %304 = vst [vmem:[#allocation2] sm:$0xff] %v145
    %305 = vst [vmem:[#allocation2 + $0x8] sm:$0xff] %v147
    %306 = vst [vmem:[#allocation2 + $0x10] sm:$0xff] %v258
    %307 = vst [vmem:[#allocation2 + $0x18] sm:$0xff] %v260
    %308 = vst [vmem:[#allocation2 + $0x20] sm:$0xff] %v151
    %309 = vst [vmem:[#allocation2 + $0x28] sm:$0xff] %v153
    %310 = vst [vmem:[#allocation2 + $0x30] sm:$0xff] %v264
    %311 = vst [vmem:[#allocation2 + $0x38] sm:$0xff] %v266
    %312 = vst [vmem:[#allocation2 + $0x40] sm:$0xff] %v157
    %313 = vst [vmem:[#allocation2 + $0x48] sm:$0xff] %v159
    %314 = vst [vmem:[#allocation2 + $0x50] sm:$0xff] %v270
    %315 = vst [vmem:[#allocation2 + $0x58] sm:$0xff] %v272
    %316 = vst [vmem:[#allocation2 + $0x60] sm:$0xff] %v163
    %317 = vst [vmem:[#allocation2 + $0x68] sm:$0xff] %v165
    %318 = vst [vmem:[#allocation2 + $0x70] sm:$0xff] %v276
    %319 = vst [vmem:[#allocation2 + $0x78] sm:$0xff] %v278
    %320 = vst [vmem:[#allocation2 + $0x80] sm:$0xff] %v169
    %321 = vst [vmem:[#allocation2 + $0x88] sm:$0xff] %v171
    %322 = vst [vmem:[#allocation2 + $0x90] sm:$0xff] %v282
    %323 = vst [vmem:[#allocation2 + $0x98] sm:$0xff] %v284
    %324 = vst [vmem:[#allocation2 + $0xa0] sm:$0xff] %v175
    %325 = vst [vmem:[#allocation2 + $0xa8] sm:$0xff] %v177
    %326 = vst [vmem:[#allocation2 + $0xb0] sm:$0xff] %v288
    %327 = vst [vmem:[#allocation2 + $0xb8] sm:$0xff] %v290
    %328 = vst [vmem:[#allocation2 + $0xc0] sm:$0xff] %v181
    %329 = vst [vmem:[#allocation2 + $0xc8] sm:$0xff] %v183
    %330 = vst [vmem:[#allocation2 + $0xd0] sm:$0xff] %v294
    %331 = vst [vmem:[#allocation2 + $0xd8] sm:$0xff] %v296
    %332 = vst [vmem:[#allocation2 + $0xe0] sm:$0xff] %v187
    %333 = vst [vmem:[#allocation2 + $0xe8] sm:$0xff] %v189
    %334 = vst [vmem:[#allocation2 + $0xf0] sm:$0xff] %v300
    %335 = vst [vmem:[#allocation2 + $0xf8] sm:$0xff] %v302
    // Predicated region
    $region14: #{tpu_custom_call.1} parent=1 // pred_check
      _
    $region15: #{tpu_custom_call.1} parent=1 // pred_check_branch
      %337 = sbr.rel (0) target = $region17
    $region16: #{tpu_custom_call.1} parent=1 // pred_region
      %s339 = ssub.s32 4096, 4096
      %340 = vsyncadd [#allocation3], %s339
      %s341 = sshll.u32 [#allocation2], 4
      %s342 = int_to_ptr.vmem [resolvable:$true] %s341
      %347 = dma.vmem_to_hbm [thread:$0]  %s342, 4096, %s3, [#allocation3], 512, 512, 32
    $region17: #{tpu_custom_call.1} parent=1 // pred_fallthru
      _
    // Predicated region
    $region18: #{tpu_custom_call.1} parent=1 // pred_check
      _
    $region19: #{tpu_custom_call.1} parent=1 // pred_check_branch
      %349 = sbr.rel (0) target = $region21
    $region20: #{tpu_custom_call.1} parent=1 // pred_region
      %350 = dma.done [#allocation3], 4096
    $region21: #{tpu_custom_call.1} parent=1 // pred_fallthru
      _
    %351 = vsyncpa [#allocation3], 1

</llo_original>
